<compile_context>
chip_gen: v6e
topology: v6e:2x2x1
jax: 0.10.0
libtpu: 0.0.40
codegen_flags: <defaults>
</compile_context>

<pallas_src>
import functools

import jax
import jax.numpy as jnp
import numpy as np
from jax import lax
from jax.experimental import pallas as pl
from jax.experimental.pallas import tpu as pltpu

NEG_MASK = -1000000.0
NEG_SPAN = -1000.0


def _span_kernel(sen_ref, v_ref, mmul_ref, madd_ref, out_ref, *, bt, bt_pad, b_tile):
    f32 = jnp.float32

    # Grid-invariant index masks (at most one (bt, bt_pad) vreg slab each).
    r_t = lax.broadcasted_iota(jnp.int32, (bt, bt), 0)        # row = position s
    c_t = lax.broadcasted_iota(jnp.int32, (bt, bt), 1)        # col = token j
    m_lt = (c_t < r_t).astype(f32)                            # exclusive-prefix mask
    r_o = lax.broadcasted_iota(jnp.int32, (bt, bt_pad), 0)    # start index s
    c_o = lax.broadcasted_iota(jnp.int32, (bt, bt_pad), 1)    # end index e (padded)
    sel = (r_o == c_o).astype(f32)                            # column -> padded-row selector
    upper = r_o <= c_o                                        # s <= e region
    two = lax.broadcasted_iota(jnp.int32, (bt, 2), 1)         # builds [lse | s_i] w/o concat

    for i in range(b_tile):
        # Projection: (bt, dim) @ (dim, 3) -> per-token (B, I, O) scores.
        s_bio = jnp.dot(sen_ref[i], v_ref[i], preferred_element_type=f32)
        # Fold in bias.x and the padding mask (exact for 0/1 masks).
        s_bio = s_bio * mmul_ref[i] + madd_ref[i]             # (bt, 3)
        s_b = s_bio[:, 0:1]
        s_i = s_bio[:, 1:2]
        s_o = s_bio[:, 2:3]

        # Per-token log-sum-exp over (B, I, O).
        bm = jnp.maximum(jnp.maximum(s_b, s_i), s_o)
        lse = bm + jnp.log(jnp.exp(s_b - bm) + jnp.exp(s_i - bm) + jnp.exp(s_o - bm))

        # One triangular matmul gives both exclusive prefixes:
        #   fwd[s]   = sum_{j<s} lse[j]       (== forward_scores[s])
        #   pre_i[s] = sum_{j<s} scores_i[j]
        p2 = jnp.where(two == 0, lse, s_i)                    # (bt, 2) = [lse | s_i]
        pref = jnp.dot(m_lt, p2, preferred_element_type=f32)  # (bt, 2)
        fwd = pref[:, 0:1]
        pre_i = pref[:, 1:2]

        # span[s, e] = a[s] + b[e]   (full_scores cancels between the terms):
        #   a[s] = scores_b[s] + forward_scores[s] - pre_i[s]
        #   b[e] = scores_o[e] + backward_scores[e+1] + pre_i[e] - full_scores
        #        = scores_o[e] + pre_i[e] - fwd[e] - lse[e]
        a_col = s_b + fwd - pre_i                             # (bt, 1), start-indexed
        b_col = s_o + pre_i - fwd - lse                       # (bt, 1), end-indexed
        # Move b to lane (row) orientation; padded lanes become 0 (sliced later).
        b_row = jnp.sum(b_col * sel, axis=0, keepdims=True)   # (1, bt_pad)

        span = jnp.where(upper, a_col + b_row, NEG_SPAN)      # (bt, bt_pad)
        out_ref[i] = span.astype(out_ref.dtype)


def _pick_b_tile(bs, bt):
    """Largest divisor of bs with <= ~128 token rows (and <= 16 batches) per grid step."""
    cap = max(1, min(16, 128 // max(bt, 1)))
    best = 1
    for t in range(1, min(bs, cap) + 1):
        if bs % t == 0:
            best = t
    return best


def predict_span_set(x, sen_vecs, sen_mask, params):
    """x: (bs, dim); sen_vecs: (bs, bt, dim); sen_mask: (bs, bt)."""
    bs, bt, dim = sen_vecs.shape
    wb, bb, wi, bi, wo, bo = params
    f32 = jnp.float32

    x = x.astype(f32)
    sen_vecs = sen_vecs.astype(f32)

    # ---- wrapper-side precompute (plain XLA) --------------------------------
    # Fold the query vector into the weights: V[b, :, k] = W_k^T x[b].
    v = jnp.stack(
        [x @ wb.astype(f32), x @ wi.astype(f32), x @ wo.astype(f32)], axis=-1
    )                                                          # (bs, dim, 3)
    c = jnp.stack(
        [x @ bb.astype(f32), x @ bi.astype(f32), x @ bo.astype(f32)], axis=-1
    )                                                          # (bs, 3)

    # Fold padding mask + bias term into one multiply/add pair:
    #   masked_score_k = (sen . V_k) * m + (c_k * m + (1 - m) * fill_k)
    m = (sen_mask != 0).astype(f32)                            # (bs, bt)
    mmul = jnp.broadcast_to(m[:, :, None], (bs, bt, 3))
    neg = (1.0 - m) * NEG_MASK
    madd = c[:, None, :] * mmul + jnp.stack(
        [neg, neg, jnp.zeros_like(neg)], axis=-1)              # (bs, bt, 3)

    # ---- tiling --------------------------------------------------------------
    b_tile = _pick_b_tile(bs, bt)
    n_steps = bs // b_tile
    bt_pad = ((bt + 127) // 128) * 128     # lane-dense output width, sliced below

    kernel = functools.partial(_span_kernel, bt=bt, bt_pad=bt_pad, b_tile=b_tile)
    grid_spec = pltpu.PrefetchScalarGridSpec(
        num_scalar_prefetch=0,
        grid=(n_steps,),
        in_specs=[
            pl.BlockSpec((b_tile, bt, dim), lambda g: (g, 0, 0)),  # sen_vecs
            pl.BlockSpec((b_tile, dim, 3), lambda g: (g, 0, 0)),   # V = W^T x
            pl.BlockSpec((b_tile, bt, 3), lambda g: (g, 0, 0)),    # mask (mul)
            pl.BlockSpec((b_tile, bt, 3), lambda g: (g, 0, 0)),    # mask (add) + bias.x
        ],
        out_specs=pl.BlockSpec((b_tile, bt, bt_pad), lambda g: (g, 0, 0)),
    )
    out = pl.pallas_call(
        kernel,
        out_shape=jax.ShapeDtypeStruct((bs, bt, bt_pad), f32),
        grid_spec=grid_spec,
        compiler_params=pltpu.CompilerParams(dimension_semantics=("parallel",)),
    )(sen_vecs, v, mmul, madd)
    return out[:, :, :bt] if bt_pad != bt else out


def reference_np(x, sen_vecs, sen_mask, params):
    """Direct NumPy port of the PyTorch forward (loops and all), float32."""
    x = np.asarray(x, np.float32)
    sv = np.asarray(sen_vecs, np.float32)
    m = np.asarray(sen_mask, np.float32)
    wb, bb, wi, bi, wo, bo = [np.asarray(p, np.float32) for p in params]
    bs, bt, _ = sv.shape

    def score(w, b):
        h = sv @ w.T + b
        return np.einsum('btd,bd->bt', h, x)

    sb = score(wb, bb)
    si = score(wi, bi)
    so = score(wo, bo)
    sb = np.where(m == 0, np.float32(NEG_MASK), sb)
    si = np.where(m == 0, np.float32(NEG_MASK), si)
    so = np.where(m == 0, np.float32(0.0), so)
    bio = np.stack([sb, si, so], axis=-1)

    def lse(a):
        am = a.max(-1)
        return am + np.log(np.exp(a - am[..., None]).sum(-1))

    fwd = np.zeros((bs, bt + 1), np.float32)
    bwd = np.zeros((bs, bt + 1), np.float32)
    for t in range(1, bt + 1):
        fwd[:, t] = lse(fwd[:, t - 1][:, None] + bio[:, t - 1])
        bwd[:, -t - 1] = lse(bwd[:, -t][:, None] + bio[:, -t])
    full = fwd[:, -1]

    span = np.zeros((bs, bt, bt), np.float32)
    for s in range(bt):
        for e in range(s, bt):
            span[:, e, s] = NEG_SPAN
            span[:, s, e] = (sb[:, s] + si[:, s:e].sum(-1) + fwd[:, s]
                             + bwd[:, e + 1] - full)
            span[:, s, e] += so[:, e]
    return span


if __name__ == "__main__":
    bs, bt, dim = 2, 8, 32
    key = jax.random.PRNGKey(0)
    kx, ks, kwb, kwi, kwo = jax.random.split(key, 5)

    x = jax.random.normal(kx, (bs, dim), jnp.float32)
    sen_vecs = jax.random.normal(ks, (bs, bt, dim), jnp.float32)
    sen_mask = jnp.ones((bs, bt), jnp.float32).at[1, bt - 2:].set(0.0)

    # xavier_normal-style init (std = sqrt(2 / (fan_in + fan_out))), biases = 0
    std = np.sqrt(2.0 / (dim + dim)).astype(np.float32)
    wb = jax.random.normal(kwb, (dim, dim), jnp.float32) * std
    wi = jax.random.normal(kwi, (dim, dim), jnp.float32) * std
    wo = jax.random.normal(kwo, (dim, dim), jnp.float32) * std
    bb = jnp.zeros((dim,), jnp.float32)
    bi = jnp.zeros((dim,), jnp.float32)
    bo = jnp.zeros((dim,), jnp.float32)
    params = (wb, bb, wi, bi, wo, bo)

    out = predict_span_set(x, sen_vecs, sen_mask, params)
    out = jax.block_until_ready(out)

    ref = reference_np(x, sen_vecs, sen_mask, params)
    assert out.shape == (bs, bt, bt) and out.dtype == jnp.float32
    assert np.allclose(np.asarray(out), ref, rtol=1e-4, atol=1e-2), \
        float(np.abs(np.asarray(out) - ref).max())
    print("KERNEL_OK")
</pallas_src>

<mosaic_0001>
module attributes {stable_mosaic.version = 11 : i64} {
  func.func @_span_kernel(%arg0: i32, %arg1: memref<2x8x32xf32, #tpu.memory_space<vmem>>, %arg2: memref<2x32x3xf32, #tpu.memory_space<vmem>>, %arg3: memref<2x8x3xf32, #tpu.memory_space<vmem>>, %arg4: memref<2x8x3xf32, #tpu.memory_space<vmem>>, %arg5: memref<2x8x128xf32, #tpu.memory_space<vmem>>) attributes {dimension_semantics = [#tpu.dimension_semantics<parallel>], iteration_bounds = array<i64: 1>, scalar_prefetch = 0 : i64, scratch_operands = 0 : i64, tpu.core_type = #tpu.core_type<tc>, window_params = [{transform_indices = @transform_0, window_bounds = array<i64: 2, 8, 32>}, {transform_indices = @transform_1, window_bounds = array<i64: 2, 32, 3>}, {transform_indices = @transform_2, window_bounds = array<i64: 2, 8, 3>}, {transform_indices = @transform_3, window_bounds = array<i64: 2, 8, 3>}, {transform_indices = @transform_4, window_bounds = array<i64: 2, 8, 128>}]} {
    %0 = tpu.iota {dimensions = array<i32: 0>} : vector<8x8xi32>
    %1 = tpu.iota {dimensions = array<i32: 1>} : vector<8x8xi32>
    %2 = arith.cmpi slt, %1, %0 : vector<8x8xi32>
    %3 = arith.extui %2 : vector<8x8xi1> to vector<8x8xi32>
    %4 = arith.sitofp %3 : vector<8x8xi32> to vector<8x8xf32>
    %5 = tpu.iota {dimensions = array<i32: 0>} : vector<8x128xi32>
    %6 = tpu.iota {dimensions = array<i32: 1>} : vector<8x128xi32>
    %7 = arith.cmpi eq, %5, %6 : vector<8x128xi32>
    %8 = arith.extui %7 : vector<8x128xi1> to vector<8x128xi32>
    %9 = arith.sitofp %8 : vector<8x128xi32> to vector<8x128xf32>
    %10 = arith.cmpi sle, %5, %6 : vector<8x128xi32>
    %11 = tpu.iota {dimensions = array<i32: 1>} : vector<8x2xi32>
    %c0 = arith.constant 0 : index
    %c0_0 = arith.constant 0 : index
    %c0_1 = arith.constant 0 : index
    %12 = vector.load %arg1[%c0, %c0_0, %c0_1] : memref<2x8x32xf32, #tpu.memory_space<vmem>>, vector<1x8x32xf32>
    %13 = vector.shape_cast %12 : vector<1x8x32xf32> to vector<8x32xf32>
    %c0_2 = arith.constant 0 : index
    %c0_3 = arith.constant 0 : index
    %c0_4 = arith.constant 0 : index
    %14 = vector.load %arg2[%c0_2, %c0_3, %c0_4] : memref<2x32x3xf32, #tpu.memory_space<vmem>>, vector<1x32x3xf32>
    %15 = vector.shape_cast %14 : vector<1x32x3xf32> to vector<32x3xf32>
    %cst = arith.constant dense<0.000000e+00> : vector<8x3xf32>
    %16 = tpu.matmul %13, %15, %cst {dimension_numbers = #tpu.dot_dimension_numbers<[1], [0], [0], [1], [0, 0, 1, 1], [], []>} : vector<8x32xf32>, vector<32x3xf32>, vector<8x3xf32> -> vector<8x3xf32>
    %c0_5 = arith.constant 0 : index
    %c0_6 = arith.constant 0 : index
    %c0_7 = arith.constant 0 : index
    %17 = vector.load %arg3[%c0_5, %c0_6, %c0_7] : memref<2x8x3xf32, #tpu.memory_space<vmem>>, vector<1x8x3xf32>
    %18 = vector.shape_cast %17 : vector<1x8x3xf32> to vector<8x3xf32>
    %19 = arith.mulf %16, %18 : vector<8x3xf32>
    %c0_8 = arith.constant 0 : index
    %c0_9 = arith.constant 0 : index
    %c0_10 = arith.constant 0 : index
    %20 = vector.load %arg4[%c0_8, %c0_9, %c0_10] : memref<2x8x3xf32, #tpu.memory_space<vmem>>, vector<1x8x3xf32>
    %21 = vector.shape_cast %20 : vector<1x8x3xf32> to vector<8x3xf32>
    %22 = arith.addf %19, %21 : vector<8x3xf32>
    %23 = vector.extract_strided_slice %22 {offsets = [0, 0], sizes = [8, 1], strides = [1, 1]} : vector<8x3xf32> to vector<8x1xf32>
    %24 = vector.extract_strided_slice %22 {offsets = [0, 1], sizes = [8, 1], strides = [1, 1]} : vector<8x3xf32> to vector<8x1xf32>
    %25 = vector.extract_strided_slice %22 {offsets = [0, 2], sizes = [8, 1], strides = [1, 1]} : vector<8x3xf32> to vector<8x1xf32>
    %26 = arith.maximumf %23, %24 : vector<8x1xf32>
    %27 = arith.maximumf %26, %25 : vector<8x1xf32>
    %28 = arith.subf %23, %27 : vector<8x1xf32>
    %29 = math.exp %28 : vector<8x1xf32>
    %30 = arith.subf %24, %27 : vector<8x1xf32>
    %31 = math.exp %30 : vector<8x1xf32>
    %32 = arith.addf %29, %31 : vector<8x1xf32>
    %33 = arith.subf %25, %27 : vector<8x1xf32>
    %34 = math.exp %33 : vector<8x1xf32>
    %35 = arith.addf %32, %34 : vector<8x1xf32>
    %36 = math.log %35 : vector<8x1xf32>
    %37 = arith.addf %27, %36 : vector<8x1xf32>
    %c0_i32 = arith.constant 0 : i32
    %38 = vector.broadcast %c0_i32 : i32 to vector<8x2xi32>
    %39 = arith.cmpi eq, %11, %38 : vector<8x2xi32>
    %40 = vector.shape_cast %37 : vector<8x1xf32> to vector<8x1xf32>
    %41 = vector.broadcast %40 : vector<8x1xf32> to vector<8x2xf32>
    %42 = vector.shape_cast %24 : vector<8x1xf32> to vector<8x1xf32>
    %43 = vector.broadcast %42 : vector<8x1xf32> to vector<8x2xf32>
    %44 = arith.select %39, %41, %43 : vector<8x2xi1>, vector<8x2xf32>
    %cst_11 = arith.constant dense<0.000000e+00> : vector<8x2xf32>
    %45 = tpu.matmul %4, %44, %cst_11 {dimension_numbers = #tpu.dot_dimension_numbers<[1], [0], [0], [1], [0, 0, 1, 1], [], []>} : vector<8x8xf32>, vector<8x2xf32>, vector<8x2xf32> -> vector<8x2xf32>
    %46 = vector.extract_strided_slice %45 {offsets = [0, 0], sizes = [8, 1], strides = [1, 1]} : vector<8x2xf32> to vector<8x1xf32>
    %47 = vector.extract_strided_slice %45 {offsets = [0, 1], sizes = [8, 1], strides = [1, 1]} : vector<8x2xf32> to vector<8x1xf32>
    %48 = arith.addf %23, %46 : vector<8x1xf32>
    %49 = arith.subf %48, %47 : vector<8x1xf32>
    %50 = arith.addf %25, %47 : vector<8x1xf32>
    %51 = arith.subf %50, %46 : vector<8x1xf32>
    %52 = arith.subf %51, %37 : vector<8x1xf32>
    %53 = vector.broadcast %52 : vector<8x1xf32> to vector<8x128xf32>
    %54 = arith.mulf %53, %9 : vector<8x128xf32>
    %cst_12 = arith.constant dense<0.000000e+00> : vector<128xf32>
    %55 = vector.multi_reduction <add>, %54, %cst_12 [0] : vector<8x128xf32> to vector<128xf32>
    %56 = vector.shape_cast %55 : vector<128xf32> to vector<1x128xf32>
    %57 = vector.broadcast %49 : vector<8x1xf32> to vector<8x128xf32>
    %58 = vector.broadcast %56 : vector<1x128xf32> to vector<8x128xf32>
    %59 = arith.addf %57, %58 : vector<8x128xf32>
    %cst_13 = arith.constant -1.000000e+03 : f32
    %60 = vector.broadcast %cst_13 : f32 to vector<8x128xf32>
    %61 = arith.select %10, %59, %60 : vector<8x128xi1>, vector<8x128xf32>
    %c0_14 = arith.constant 0 : index
    %c0_15 = arith.constant 0 : index
    %c0_16 = arith.constant 0 : index
    %62 = vector.load %arg5[%c0_14, %c0_15, %c0_16] : memref<2x8x128xf32, #tpu.memory_space<vmem>>, vector<1x8x128xf32>
    %63 = vector.shape_cast %62 : vector<1x8x128xf32> to vector<8x128xf32>
    %64 = vector.shape_cast %61 : vector<8x128xf32> to vector<1x8x128xf32>
    tpu.vector_store %arg5[%c0_14, %c0_15, %c0_16], %64 {strides = array<i32>} : memref<2x8x128xf32, #tpu.memory_space<vmem>>, vector<1x8x128xf32>,
    %c1 = arith.constant 1 : index
    %c0_17 = arith.constant 0 : index
    %c0_18 = arith.constant 0 : index
    %65 = vector.load %arg1[%c1, %c0_17, %c0_18] : memref<2x8x32xf32, #tpu.memory_space<vmem>>, vector<1x8x32xf32>
    %66 = vector.shape_cast %65 : vector<1x8x32xf32> to vector<8x32xf32>
    %c1_19 = arith.constant 1 : index
    %c0_20 = arith.constant 0 : index
    %c0_21 = arith.constant 0 : index
    %67 = vector.load %arg2[%c1_19, %c0_20, %c0_21] : memref<2x32x3xf32, #tpu.memory_space<vmem>>, vector<1x32x3xf32>
    %68 = vector.shape_cast %67 : vector<1x32x3xf32> to vector<32x3xf32>
    %cst_22 = arith.constant dense<0.000000e+00> : vector<8x3xf32>
    %69 = tpu.matmul %66, %68, %cst_22 {dimension_numbers = #tpu.dot_dimension_numbers<[1], [0], [0], [1], [0, 0, 1, 1], [], []>} : vector<8x32xf32>, vector<32x3xf32>, vector<8x3xf32> -> vector<8x3xf32>
    %c1_23 = arith.constant 1 : index
    %c0_24 = arith.constant 0 : index
    %c0_25 = arith.constant 0 : index
    %70 = vector.load %arg3[%c1_23, %c0_24, %c0_25] : memref<2x8x3xf32, #tpu.memory_space<vmem>>, vector<1x8x3xf32>
    %71 = vector.shape_cast %70 : vector<1x8x3xf32> to vector<8x3xf32>
    %72 = arith.mulf %69, %71 : vector<8x3xf32>
    %c1_26 = arith.constant 1 : index
    %c0_27 = arith.constant 0 : index
    %c0_28 = arith.constant 0 : index
    %73 = vector.load %arg4[%c1_26, %c0_27, %c0_28] : memref<2x8x3xf32, #tpu.memory_space<vmem>>, vector<1x8x3xf32>
    %74 = vector.shape_cast %73 : vector<1x8x3xf32> to vector<8x3xf32>
    %75 = arith.addf %72, %74 : vector<8x3xf32>
    %76 = vector.extract_strided_slice %75 {offsets = [0, 0], sizes = [8, 1], strides = [1, 1]} : vector<8x3xf32> to vector<8x1xf32>
    %77 = vector.extract_strided_slice %75 {offsets = [0, 1], sizes = [8, 1], strides = [1, 1]} : vector<8x3xf32> to vector<8x1xf32>
    %78 = vector.extract_strided_slice %75 {offsets = [0, 2], sizes = [8, 1], strides = [1, 1]} : vector<8x3xf32> to vector<8x1xf32>
    %79 = arith.maximumf %76, %77 : vector<8x1xf32>
    %80 = arith.maximumf %79, %78 : vector<8x1xf32>
    %81 = arith.subf %76, %80 : vector<8x1xf32>
    %82 = math.exp %81 : vector<8x1xf32>
    %83 = arith.subf %77, %80 : vector<8x1xf32>
    %84 = math.exp %83 : vector<8x1xf32>
    %85 = arith.addf %82, %84 : vector<8x1xf32>
    %86 = arith.subf %78, %80 : vector<8x1xf32>
    %87 = math.exp %86 : vector<8x1xf32>
    %88 = arith.addf %85, %87 : vector<8x1xf32>
    %89 = math.log %88 : vector<8x1xf32>
    %90 = arith.addf %80, %89 : vector<8x1xf32>
    %c0_i32_29 = arith.constant 0 : i32
    %91 = vector.broadcast %c0_i32_29 : i32 to vector<8x2xi32>
    %92 = arith.cmpi eq, %11, %91 : vector<8x2xi32>
    %93 = vector.shape_cast %90 : vector<8x1xf32> to vector<8x1xf32>
    %94 = vector.broadcast %93 : vector<8x1xf32> to vector<8x2xf32>
    %95 = vector.shape_cast %77 : vector<8x1xf32> to vector<8x1xf32>
    %96 = vector.broadcast %95 : vector<8x1xf32> to vector<8x2xf32>
    %97 = arith.select %92, %94, %96 : vector<8x2xi1>, vector<8x2xf32>
    %cst_30 = arith.constant dense<0.000000e+00> : vector<8x2xf32>
    %98 = tpu.matmul %4, %97, %cst_30 {dimension_numbers = #tpu.dot_dimension_numbers<[1], [0], [0], [1], [0, 0, 1, 1], [], []>} : vector<8x8xf32>, vector<8x2xf32>, vector<8x2xf32> -> vector<8x2xf32>
    %99 = vector.extract_strided_slice %98 {offsets = [0, 0], sizes = [8, 1], strides = [1, 1]} : vector<8x2xf32> to vector<8x1xf32>
    %100 = vector.extract_strided_slice %98 {offsets = [0, 1], sizes = [8, 1], strides = [1, 1]} : vector<8x2xf32> to vector<8x1xf32>
    %101 = arith.addf %76, %99 : vector<8x1xf32>
    %102 = arith.subf %101, %100 : vector<8x1xf32>
    %103 = arith.addf %78, %100 : vector<8x1xf32>
    %104 = arith.subf %103, %99 : vector<8x1xf32>
    %105 = arith.subf %104, %90 : vector<8x1xf32>
    %106 = vector.broadcast %105 : vector<8x1xf32> to vector<8x128xf32>
    %107 = arith.mulf %106, %9 : vector<8x128xf32>
    %cst_31 = arith.constant dense<0.000000e+00> : vector<128xf32>
    %108 = vector.multi_reduction <add>, %107, %cst_31 [0] : vector<8x128xf32> to vector<128xf32>
    %109 = vector.shape_cast %108 : vector<128xf32> to vector<1x128xf32>
    %110 = vector.broadcast %102 : vector<8x1xf32> to vector<8x128xf32>
    %111 = vector.broadcast %109 : vector<1x128xf32> to vector<8x128xf32>
    %112 = arith.addf %110, %111 : vector<8x128xf32>
    %cst_32 = arith.constant -1.000000e+03 : f32
    %113 = vector.broadcast %cst_32 : f32 to vector<8x128xf32>
    %114 = arith.select %10, %112, %113 : vector<8x128xi1>, vector<8x128xf32>
    %c1_33 = arith.constant 1 : index
    %c0_34 = arith.constant 0 : index
    %c0_35 = arith.constant 0 : index
    %115 = vector.load %arg5[%c1_33, %c0_34, %c0_35] : memref<2x8x128xf32, #tpu.memory_space<vmem>>, vector<1x8x128xf32>
    %116 = vector.shape_cast %115 : vector<1x8x128xf32> to vector<8x128xf32>
    %117 = vector.shape_cast %114 : vector<8x128xf32> to vector<1x8x128xf32>
    tpu.vector_store %arg5[%c1_33, %c0_34, %c0_35], %117 {strides = array<i32>} : memref<2x8x128xf32, #tpu.memory_space<vmem>>, vector<1x8x128xf32>,
    return
  }
  func.func @transform_0(%arg0: i32) -> (i32, i32, i32) {
    %c0_i32 = arith.constant 0 : i32
    %c0_i32_0 = arith.constant 0 : i32
    %c0_i32_1 = arith.constant 0 : i32
    return %arg0, %c0_i32, %c0_i32_0 : i32, i32, i32
  }
  func.func @transform_1(%arg0: i32) -> (i32, i32, i32) {
    %c0_i32 = arith.constant 0 : i32
    %c0_i32_0 = arith.constant 0 : i32
    %c0_i32_1 = arith.constant 0 : i32
    return %arg0, %c0_i32, %c0_i32_0 : i32, i32, i32
  }
  func.func @transform_2(%arg0: i32) -> (i32, i32, i32) {
    %c0_i32 = arith.constant 0 : i32
    %c0_i32_0 = arith.constant 0 : i32
    %c0_i32_1 = arith.constant 0 : i32
    return %arg0, %c0_i32, %c0_i32_0 : i32, i32, i32
  }
  func.func @transform_3(%arg0: i32) -> (i32, i32, i32) {
    %c0_i32 = arith.constant 0 : i32
    %c0_i32_0 = arith.constant 0 : i32
    %c0_i32_1 = arith.constant 0 : i32
    return %arg0, %c0_i32, %c0_i32_0 : i32, i32, i32
  }
  func.func @transform_4(%arg0: i32) -> (i32, i32, i32) {
    %c0_i32 = arith.constant 0 : i32
    %c0_i32_0 = arith.constant 0 : i32
    %c0_i32_1 = arith.constant 0 : i32
    return %arg0, %c0_i32, %c0_i32_0 : i32, i32, i32
  }
}

</mosaic_0001>

<llo_original>
// kernel: tpu_custom_call.1
$region0: #{tpu_custom_call.1}
  #allocation0 [shape = 'u32[]', space=smem, size = 0x4, offset = 0x4, fixed_abs, tag = 'smem constant byte address 0x4 - core index']
  #allocation1 [shape = 'u32[144,128]{1,0:T(1,128)}', space=vmem, size = 0x12000, scoped, tag = 'internal scratch']
  %s0 = inlined_call_operand.vmem [shape: f32[2,8,32], index: 0, kind: input, shape index: {}]
  %s1 = inlined_call_operand.vmem [shape: f32[2,32,3], index: 1, kind: input, shape index: {}]
  %s2 = inlined_call_operand.vmem [shape: f32[2,8,3], index: 2, kind: input, shape index: {}]
  %s3 = inlined_call_operand.vmem [shape: f32[2,8,3], index: 3, kind: input, shape index: {}]
  %s4 = inlined_call_operand.hbm [shape: f32[2,8,128], index: 4, kind: output, shape index: {}]
  %s5 = sld [smem:[#allocation0]]
  $region26: #{tpu_custom_call.1} parent=0
    _
  %s7 = ssub.s32 1, %s5
  %s8 = scalar_select 0, %s7, %s5
  $region1: #{tpu_custom_call.1} parent=0
    #allocation2 [shape = 'u8[8192]{0}', space=vmem, size = 0x2000, scoped, tag = 'output window, operand 0, single buffered']
    #allocation3 [shape = 's32[1]{0}', space=sflag, size = 0x4, scoped, tag = 'scoped memory for tpu_custom_call.1']
    %9 = vsyncpa [#allocation3], 0
    // Predicated region
    $region2: #{tpu_custom_call.1} parent=1 // pred_check
      _
    $region3: #{tpu_custom_call.1} parent=1 // pred_check_branch
      %11 = sbr.rel (0) target = $region5
    $region4: #{tpu_custom_call.1} parent=1 // pred_region
      _
    $region5: #{tpu_custom_call.1} parent=1 // pred_fallthru
      _
    // Predicated region
    $region6: #{tpu_custom_call.1} parent=1 // pred_check
      _
    $region7: #{tpu_custom_call.1} parent=1 // pred_check_branch
      %13 = sbr.rel (0) target = $region9
    $region8: #{tpu_custom_call.1} parent=1 // pred_region
      _
    $region9: #{tpu_custom_call.1} parent=1 // pred_fallthru
      _
    // Predicated region
    $region10: #{tpu_custom_call.1} parent=1 // pred_check
      _
    $region11: #{tpu_custom_call.1} parent=1 // pred_check_branch
      %15 = sbr.rel (0) target = $region13
    $region12: #{tpu_custom_call.1} parent=1 // pred_region
      _
    $region13: #{tpu_custom_call.1} parent=1 // pred_fallthru
      _
    // Predicated region
    $region14: #{tpu_custom_call.1} parent=1 // pred_check
      _
    $region15: #{tpu_custom_call.1} parent=1 // pred_check_branch
      %17 = sbr.rel (0) target = $region17
    $region16: #{tpu_custom_call.1} parent=1 // pred_region
      _
    $region17: #{tpu_custom_call.1} parent=1 // pred_fallthru
      _
    %v18 = vlaneseq
    %v19 = vshrl.u32 %v18, 7
    %v20 = vlaneseq
    %v21 = vand.u32 %v20, 127
    %vm22 = vcmp.lt.s32.totalorder %v21, %v19
    %v23 = vsel %vm22, 1, 0
    %v24 = vcvt.s32.f32 %v23
    %vm25 = vcmp.eq.s32.totalorder %v19, %v21
    %v26 = vsel %vm25, 1, 0
    %v27 = vcvt.s32.f32 %v26
    %vm28 = vcmp.le.s32.totalorder %v19, %v21
    %v29 = vld [vmem:[%s0] sm:$0xff]
    %v30 = vld [vmem:[%s1] sm:$0xff]
    %v31 = vld [vmem:[%s1 + $0x8] sm:$0xff]
    %v32 = vld [vmem:[%s1 + $0x10] sm:$0xff]
    %v33 = vld [vmem:[%s1 + $0x18] sm:$0xff]
    %vm34 = vcmask 261120
    %v36 = vsel %vm34, %v29, 0
    %38 = vmatprep.subr.mxu0 0.0
    %39 = vmatpush1.msra.mxu0 0.0
    %40 = vmatprep.subr.mxu0 0.0
    %41 = vmatpush1.msra.mxu0 0.0
    %42 = vmatprep.subr.mxu0 0.0
    %43 = vmatpush1.msra.mxu0 0.0
    %44 = vmatprep.subr.mxu0 0.0
    %45 = vmatpush1.msra.mxu0 0.0
    %46 = vmatprep.subr.mxu0 0.0
    %47 = vmatpush1.msra.mxu0 0.0
    %48 = vmatprep.subr.mxu0 0.0
    %49 = vmatpush1.msra.mxu0 0.0
    %50 = vmatprep.subr.mxu0 0.0
    %51 = vmatpush1.msra.mxu0 0.0
    %52 = vmatprep.subr.mxu0 0.0
    %53 = vmatpush1.msra.mxu0 0.0
    %54 = vmatprep.subr.mxu0 0.0
    %55 = vmatpush1.msra.mxu0 0.0
    %56 = vmatprep.subr.mxu0 0.0
    %57 = vmatpush1.msra.mxu0 0.0
    %58 = vmatprep.subr.mxu0 0.0
    %59 = vmatpush1.msra.mxu0 0.0
    %60 = vmatprep.subr.mxu0 0.0
    %61 = vmatpush1.msra.mxu0 0.0
    %62 = vmatprep.subr.mxu0 0.0
    %63 = vmatpush1.msra.mxu0 %v33
    %64 = vmatprep.subr.mxu0 0.0
    %65 = vmatpush1.msra.mxu0 %v32
    %66 = vmatprep.subr.mxu0 0.0
    %67 = vmatpush1.msra.mxu0 %v31
    %68 = vmatprep.subr.mxu0 0.0
    %69 = vmatpush1.msra.mxu0 %v30
    %70 = vmatprep.subr.mxu0 0.0
    %71 = vmatpush2.msra.mxu0 0.0
    %72 = vmatprep.subr.mxu0 0.0
    %73 = vmatpush2.msra.mxu0 0.0
    %74 = vmatprep.subr.mxu0 0.0
    %75 = vmatpush2.msra.mxu0 0.0
    %76 = vmatprep.subr.mxu0 0.0
    %77 = vmatpush2.msra.mxu0 0.0
    %78 = vmatprep.subr.mxu0 0.0
    %79 = vmatpush2.msra.mxu0 0.0
    %80 = vmatprep.subr.mxu0 0.0
    %81 = vmatpush2.msra.mxu0 0.0
    %82 = vmatprep.subr.mxu0 0.0
    %83 = vmatpush2.msra.mxu0 0.0
    %84 = vmatprep.subr.mxu0 0.0
    %85 = vmatpush2.msra.mxu0 0.0
    %86 = vmatprep.subr.mxu0 0.0
    %87 = vmatpush2.msra.mxu0 0.0
    %88 = vmatprep.subr.mxu0 0.0
    %89 = vmatpush2.msra.mxu0 0.0
    %90 = vmatprep.subr.mxu0 0.0
    %91 = vmatpush2.msra.mxu0 0.0
    %92 = vmatprep.subr.mxu0 0.0
    %93 = vmatpush2.msra.mxu0 0.0
    %94 = vmatprep.subr.mxu0 0.0
    %95 = vmatpush2.msra.mxu0 0.0
    %96 = vmatprep.subr.mxu0 0.0
    %97 = vmatpush2.msra.mxu0 0.0
    %98 = vmatprep.subr.mxu0 0.0
    %99 = vmatpush2.msra.mxu0 0.0
    %100 = vmatprep.subr.mxu0 0.0
    %101 = vmatpush2.msra.mxu0 0.0
    %102 = vmatprep.mubr.f32.mxu0 0.0
    %103 = vmatmul.mubr.f32.gmra.mxu0 %v36
    %v104 = vpop.f32.mrf.mxu0
    %v105 = vadd.f32 0.0, %v104
    %v106 = vpop.f32.mrf.mxu0
    %107 = vdwg.mxu0
    %v108 = vld [vmem:[%s2] sm:$0xff]
    %v109 = vmul.f32 %v105, %v108
    %v110 = vld [vmem:[%s3] sm:$0xff]
    %v111 = vadd.f32 %v109, %v110
    %113 = vrot.lane.b32.xlu0 %v111, 127
    %v114 = vpop.permute.xlu0 %113
    %v116 = vmax.f32 %v111, %v114
    %117 = vrot.lane.b32.xlu0 %v111, 126
    %v118 = vpop.permute.xlu0 %117
    %v120 = vmax.f32 %v116, %v118
    %v121 = vsub.f32 %v111, %v120
    %v122 = vmul.f32 %v121, 1.442695
    %v123 = vpow.pop %v122
    %125 = vrot.lane.b32.xlu0 %v120, 1
    %v126 = vpop.permute.xlu0 %125
    %v128 = vsub.f32 %v111, %v126
    %v129 = vmul.f32 %v128, 1.442695
    %v130 = vpow.pop %v129
    %132 = vrot.lane.b32.xlu0 %v130, 127
    %v133 = vpop.permute.xlu0 %132
    %v135 = vadd.f32 %v123, %v133
    %136 = vrot.lane.b32.xlu0 %v120, 2
    %v137 = vpop.permute.xlu0 %136
    %v139 = vsub.f32 %v111, %v137
    %v140 = vmul.f32 %v139, 1.442695
    %v141 = vpow.pop %v140
    %143 = vrot.lane.b32.xlu0 %v141, 126
    %v144 = vpop.permute.xlu0 %143
    %v146 = vadd.f32 %v135, %v144
    %v147 = vlog2.pop %v146
    %v148 = vmul.f32 %v147, 0.6931472
    %v149 = vadd.f32 %v120, %v148
    %vm150 = vcmp.eq.s32.totalorder %v21, 0
    %152 = vset.pattern.permute.xlu0 0
    %153 = vperm.xlu0 %152, %v149
    %v154 = vpop.permute.xlu0 %153
    %156 = vset.pattern.permute.xlu0 1
    %157 = vperm.xlu0 %156, %v111
    %v158 = vpop.permute.xlu0 %157
    %v160 = vsel %vm150, %v154, %v158
    %vm161 = vcmask 64512
    %v163 = vsel %vm161, %v24, 0
    %165 = vmatprep.subr.mxu0 0.0
    %166 = vmatpush1.msra.mxu0 0.0
    %167 = vmatprep.subr.mxu0 0.0
    %168 = vmatpush1.msra.mxu0 0.0
    %169 = vmatprep.subr.mxu0 0.0
    %170 = vmatpush1.msra.mxu0 0.0
    %171 = vmatprep.subr.mxu0 0.0
    %172 = vmatpush1.msra.mxu0 0.0
    %173 = vmatprep.subr.mxu0 0.0
    %174 = vmatpush1.msra.mxu0 0.0
    %175 = vmatprep.subr.mxu0 0.0
    %176 = vmatpush1.msra.mxu0 0.0
    %177 = vmatprep.subr.mxu0 0.0
    %178 = vmatpush1.msra.mxu0 0.0
    %179 = vmatprep.subr.mxu0 0.0
    %180 = vmatpush1.msra.mxu0 0.0
    %181 = vmatprep.subr.mxu0 0.0
    %182 = vmatpush1.msra.mxu0 0.0
    %183 = vmatprep.subr.mxu0 0.0
    %184 = vmatpush1.msra.mxu0 0.0
    %185 = vmatprep.subr.mxu0 0.0
    %186 = vmatpush1.msra.mxu0 0.0
    %187 = vmatprep.subr.mxu0 0.0
    %188 = vmatpush1.msra.mxu0 0.0
    %189 = vmatprep.subr.mxu0 0.0
    %190 = vmatpush1.msra.mxu0 0.0
    %191 = vmatprep.subr.mxu0 0.0
    %192 = vmatpush1.msra.mxu0 0.0
    %193 = vmatprep.subr.mxu0 0.0
    %194 = vmatpush1.msra.mxu0 0.0
    %195 = vmatprep.subr.mxu0 0.0
    %196 = vmatpush1.msra.mxu0 %v160
    %197 = vmatprep.subr.mxu0 0.0
    %198 = vmatpush2.msra.mxu0 0.0
    %199 = vmatprep.subr.mxu0 0.0
    %200 = vmatpush2.msra.mxu0 0.0
    %201 = vmatprep.subr.mxu0 0.0
    %202 = vmatpush2.msra.mxu0 0.0
    %203 = vmatprep.subr.mxu0 0.0
    %204 = vmatpush2.msra.mxu0 0.0
    %205 = vmatprep.subr.mxu0 0.0
    %206 = vmatpush2.msra.mxu0 0.0
    %207 = vmatprep.subr.mxu0 0.0
    %208 = vmatpush2.msra.mxu0 0.0
    %209 = vmatprep.subr.mxu0 0.0
    %210 = vmatpush2.msra.mxu0 0.0
    %211 = vmatprep.subr.mxu0 0.0
    %212 = vmatpush2.msra.mxu0 0.0
    %213 = vmatprep.subr.mxu0 0.0
    %214 = vmatpush2.msra.mxu0 0.0
    %215 = vmatprep.subr.mxu0 0.0
    %216 = vmatpush2.msra.mxu0 0.0
    %217 = vmatprep.subr.mxu0 0.0
    %218 = vmatpush2.msra.mxu0 0.0
    %219 = vmatprep.subr.mxu0 0.0
    %220 = vmatpush2.msra.mxu0 0.0
    %221 = vmatprep.subr.mxu0 0.0
    %222 = vmatpush2.msra.mxu0 0.0
    %223 = vmatprep.subr.mxu0 0.0
    %224 = vmatpush2.msra.mxu0 0.0
    %225 = vmatprep.subr.mxu0 0.0
    %226 = vmatpush2.msra.mxu0 0.0
    %227 = vmatprep.subr.mxu0 0.0
    %228 = vmatpush2.msra.mxu0 0.0
    %229 = vmatprep.mubr.f32.mxu0 0.0
    %230 = vmatmul.mubr.f32.gmra.mxu0 %v163
    %v231 = vpop.f32.mrf.mxu0
    %v232 = vadd.f32 0.0, %v231
    %v233 = vpop.f32.mrf.mxu0
    %234 = vdwg.mxu0
    %v235 = vadd.f32 %v111, %v232
    %237 = vrot.lane.b32.xlu0 %v232, 127
    %v238 = vpop.permute.xlu0 %237
    %v240 = vsub.f32 %v235, %v238
    %241 = vrot.lane.b32.xlu0 %v232, 1
    %v242 = vpop.permute.xlu0 %241
    %v244 = vadd.f32 %v111, %v242
    %245 = vrot.lane.b32.xlu0 %v232, 2
    %v246 = vpop.permute.xlu0 %245
    %v248 = vsub.f32 %v244, %v246
    %249 = vrot.lane.b32.xlu0 %v149, 2
    %v250 = vpop.permute.xlu0 %249
    %v252 = vsub.f32 %v248, %v250
    %254 = vset.pattern.permute.xlu0 2
    %255 = vperm.xlu0 %254, %v252
    %v256 = vpop.permute.xlu0 %255
    %v258 = vmul.f32 %v256, %v27
    %v259 = vrot.slane %v258, 4
    %v260 = vadd.f32 %v258, %v259
    %v261 = vrot.slane %v260, 2
    %v262 = vadd.f32 %v260, %v261
    %v263 = vrot.slane %v262, 1
    %v264 = vadd.f32 %v262, %v263
    %266 = vset.pattern.permute.xlu0 0
    %267 = vperm.xlu0 %266, %v240
    %v268 = vpop.permute.xlu0 %267
    %v270 = vadd.f32 %v268, %v264
    %v271 = vsel %vm28, %v270, -1000.0
    %272 = vst [vmem:[#allocation2] sm:$0xff] %v271
    %s273 = scalar_lea.vmem %s0, 8
    %v274 = vld [vmem:[%s273] sm:$0xff]
    %s275 = scalar_lea.vmem %s1, 32
    %v276 = vld [vmem:[%s275] sm:$0xff]
    %v277 = vld [vmem:[%s275 + $0x8] sm:$0xff]
    %v278 = vld [vmem:[%s275 + $0x10] sm:$0xff]
    %v279 = vld [vmem:[%s275 + $0x18] sm:$0xff]
    %v281 = vsel %vm34, %v274, 0
    %283 = vmatprep.subr.mxu0 0.0
    %284 = vmatpush1.msra.mxu0 0.0
    %285 = vmatprep.subr.mxu0 0.0
    %286 = vmatpush1.msra.mxu0 0.0
    %287 = vmatprep.subr.mxu0 0.0
    %288 = vmatpush1.msra.mxu0 0.0
    %289 = vmatprep.subr.mxu0 0.0
    %290 = vmatpush1.msra.mxu0 0.0
    %291 = vmatprep.subr.mxu0 0.0
    %292 = vmatpush1.msra.mxu0 0.0
    %293 = vmatprep.subr.mxu0 0.0
    %294 = vmatpush1.msra.mxu0 0.0
    %295 = vmatprep.subr.mxu0 0.0
    %296 = vmatpush1.msra.mxu0 0.0
    %297 = vmatprep.subr.mxu0 0.0
    %298 = vmatpush1.msra.mxu0 0.0
    %299 = vmatprep.subr.mxu0 0.0
    %300 = vmatpush1.msra.mxu0 0.0
    %301 = vmatprep.subr.mxu0 0.0
    %302 = vmatpush1.msra.mxu0 0.0
    %303 = vmatprep.subr.mxu0 0.0
    %304 = vmatpush1.msra.mxu0 0.0
    %305 = vmatprep.subr.mxu0 0.0
    %306 = vmatpush1.msra.mxu0 0.0
    %307 = vmatprep.subr.mxu0 0.0
    %308 = vmatpush1.msra.mxu0 %v279
    %309 = vmatprep.subr.mxu0 0.0
    %310 = vmatpush1.msra.mxu0 %v278
    %311 = vmatprep.subr.mxu0 0.0
    %312 = vmatpush1.msra.mxu0 %v277
    %313 = vmatprep.subr.mxu0 0.0
    %314 = vmatpush1.msra.mxu0 %v276
    %315 = vmatprep.subr.mxu0 0.0
    %316 = vmatpush2.msra.mxu0 0.0
    %317 = vmatprep.subr.mxu0 0.0
    %318 = vmatpush2.msra.mxu0 0.0
    %319 = vmatprep.subr.mxu0 0.0
    %320 = vmatpush2.msra.mxu0 0.0
    %321 = vmatprep.subr.mxu0 0.0
    %322 = vmatpush2.msra.mxu0 0.0
    %323 = vmatprep.subr.mxu0 0.0
    %324 = vmatpush2.msra.mxu0 0.0
    %325 = vmatprep.subr.mxu0 0.0
    %326 = vmatpush2.msra.mxu0 0.0
    %327 = vmatprep.subr.mxu0 0.0
    %328 = vmatpush2.msra.mxu0 0.0
    %329 = vmatprep.subr.mxu0 0.0
    %330 = vmatpush2.msra.mxu0 0.0
    %331 = vmatprep.subr.mxu0 0.0
    %332 = vmatpush2.msra.mxu0 0.0
    %333 = vmatprep.subr.mxu0 0.0
    %334 = vmatpush2.msra.mxu0 0.0
    %335 = vmatprep.subr.mxu0 0.0
    %336 = vmatpush2.msra.mxu0 0.0
    %337 = vmatprep.subr.mxu0 0.0
    %338 = vmatpush2.msra.mxu0 0.0
    %339 = vmatprep.subr.mxu0 0.0
    %340 = vmatpush2.msra.mxu0 0.0
    %341 = vmatprep.subr.mxu0 0.0
    %342 = vmatpush2.msra.mxu0 0.0
    %343 = vmatprep.subr.mxu0 0.0
    %344 = vmatpush2.msra.mxu0 0.0
    %345 = vmatprep.subr.mxu0 0.0
    %346 = vmatpush2.msra.mxu0 0.0
    %347 = vmatprep.mubr.f32.mxu0 0.0
    %348 = vmatmul.mubr.f32.gmra.mxu0 %v281
    %v349 = vpop.f32.mrf.mxu0
    %v350 = vadd.f32 0.0, %v349
    %v351 = vpop.f32.mrf.mxu0
    %352 = vdwg.mxu0
    %s353 = scalar_lea.vmem %s2, 8
    %v354 = vld [vmem:[%s353] sm:$0xff]
    %v355 = vmul.f32 %v350, %v354
    %s356 = scalar_lea.vmem %s3, 8
    %v357 = vld [vmem:[%s356] sm:$0xff]
    %v358 = vadd.f32 %v355, %v357
    %360 = vrot.lane.b32.xlu0 %v358, 127
    %v361 = vpop.permute.xlu0 %360
    %v363 = vmax.f32 %v358, %v361
    %364 = vrot.lane.b32.xlu0 %v358, 126
    %v365 = vpop.permute.xlu0 %364
    %v367 = vmax.f32 %v363, %v365
    %v368 = vsub.f32 %v358, %v367
    %v369 = vmul.f32 %v368, 1.442695
    %v370 = vpow.pop %v369
    %372 = vrot.lane.b32.xlu0 %v367, 1
    %v373 = vpop.permute.xlu0 %372
    %v375 = vsub.f32 %v358, %v373
    %v376 = vmul.f32 %v375, 1.442695
    %v377 = vpow.pop %v376
    %379 = vrot.lane.b32.xlu0 %v377, 127
    %v380 = vpop.permute.xlu0 %379
    %v382 = vadd.f32 %v370, %v380
    %383 = vrot.lane.b32.xlu0 %v367, 2
    %v384 = vpop.permute.xlu0 %383
    %v386 = vsub.f32 %v358, %v384
    %v387 = vmul.f32 %v386, 1.442695
    %v388 = vpow.pop %v387
    %390 = vrot.lane.b32.xlu0 %v388, 126
    %v391 = vpop.permute.xlu0 %390
    %v393 = vadd.f32 %v382, %v391
    %v394 = vlog2.pop %v393
    %v395 = vmul.f32 %v394, 0.6931472
    %v396 = vadd.f32 %v367, %v395
    %398 = vset.pattern.permute.xlu0 0
    %399 = vperm.xlu0 %398, %v396
    %v400 = vpop.permute.xlu0 %399
    %402 = vset.pattern.permute.xlu0 1
    %403 = vperm.xlu0 %402, %v358
    %v404 = vpop.permute.xlu0 %403
    %v406 = vsel %vm150, %v400, %v404
    %407 = vmatprep.subr.mxu0 0.0
    %408 = vmatpush1.msra.mxu0 0.0
    %409 = vmatprep.subr.mxu0 0.0
    %410 = vmatpush1.msra.mxu0 0.0
    %411 = vmatprep.subr.mxu0 0.0
    %412 = vmatpush1.msra.mxu0 0.0
    %413 = vmatprep.subr.mxu0 0.0
    %414 = vmatpush1.msra.mxu0 0.0
    %415 = vmatprep.subr.mxu0 0.0
    %416 = vmatpush1.msra.mxu0 0.0
    %417 = vmatprep.subr.mxu0 0.0
    %418 = vmatpush1.msra.mxu0 0.0
    %419 = vmatprep.subr.mxu0 0.0
    %420 = vmatpush1.msra.mxu0 0.0
    %421 = vmatprep.subr.mxu0 0.0
    %422 = vmatpush1.msra.mxu0 0.0
    %423 = vmatprep.subr.mxu0 0.0
    %424 = vmatpush1.msra.mxu0 0.0
    %425 = vmatprep.subr.mxu0 0.0
    %426 = vmatpush1.msra.mxu0 0.0
    %427 = vmatprep.subr.mxu0 0.0
    %428 = vmatpush1.msra.mxu0 0.0
    %429 = vmatprep.subr.mxu0 0.0
    %430 = vmatpush1.msra.mxu0 0.0
    %431 = vmatprep.subr.mxu0 0.0
    %432 = vmatpush1.msra.mxu0 0.0
    %433 = vmatprep.subr.mxu0 0.0
    %434 = vmatpush1.msra.mxu0 0.0
    %435 = vmatprep.subr.mxu0 0.0
    %436 = vmatpush1.msra.mxu0 0.0
    %437 = vmatprep.subr.mxu0 0.0
    %438 = vmatpush1.msra.mxu0 %v406
    %439 = vmatprep.subr.mxu0 0.0
    %440 = vmatpush2.msra.mxu0 0.0
    %441 = vmatprep.subr.mxu0 0.0
    %442 = vmatpush2.msra.mxu0 0.0
    %443 = vmatprep.subr.mxu0 0.0
    %444 = vmatpush2.msra.mxu0 0.0
    %445 = vmatprep.subr.mxu0 0.0
    %446 = vmatpush2.msra.mxu0 0.0
    %447 = vmatprep.subr.mxu0 0.0
    %448 = vmatpush2.msra.mxu0 0.0
    %449 = vmatprep.subr.mxu0 0.0
    %450 = vmatpush2.msra.mxu0 0.0
    %451 = vmatprep.subr.mxu0 0.0
    %452 = vmatpush2.msra.mxu0 0.0
    %453 = vmatprep.subr.mxu0 0.0
    %454 = vmatpush2.msra.mxu0 0.0
    %455 = vmatprep.subr.mxu0 0.0
    %456 = vmatpush2.msra.mxu0 0.0
    %457 = vmatprep.subr.mxu0 0.0
    %458 = vmatpush2.msra.mxu0 0.0
    %459 = vmatprep.subr.mxu0 0.0
    %460 = vmatpush2.msra.mxu0 0.0
    %461 = vmatprep.subr.mxu0 0.0
    %462 = vmatpush2.msra.mxu0 0.0
    %463 = vmatprep.subr.mxu0 0.0
    %464 = vmatpush2.msra.mxu0 0.0
    %465 = vmatprep.subr.mxu0 0.0
    %466 = vmatpush2.msra.mxu0 0.0
    %467 = vmatprep.subr.mxu0 0.0
    %468 = vmatpush2.msra.mxu0 0.0
    %469 = vmatprep.subr.mxu0 0.0
    %470 = vmatpush2.msra.mxu0 0.0
    %471 = vmatprep.mubr.f32.mxu0 0.0
    %472 = vmatmul.mubr.f32.gmra.mxu0 %v163
    %v473 = vpop.f32.mrf.mxu0
    %v474 = vadd.f32 0.0, %v473
    %v475 = vpop.f32.mrf.mxu0
    %476 = vdwg.mxu0
    %v477 = vadd.f32 %v358, %v474
    %479 = vrot.lane.b32.xlu0 %v474, 127
    %v480 = vpop.permute.xlu0 %479
    %v482 = vsub.f32 %v477, %v480
    %483 = vrot.lane.b32.xlu0 %v474, 1
    %v484 = vpop.permute.xlu0 %483
    %v486 = vadd.f32 %v358, %v484
    %487 = vrot.lane.b32.xlu0 %v474, 2
    %v488 = vpop.permute.xlu0 %487
    %v490 = vsub.f32 %v486, %v488
    %491 = vrot.lane.b32.xlu0 %v396, 2
    %v492 = vpop.permute.xlu0 %491
    %v494 = vsub.f32 %v490, %v492
    %496 = vset.pattern.permute.xlu0 2
    %497 = vperm.xlu0 %496, %v494
    %v498 = vpop.permute.xlu0 %497
    %v500 = vmul.f32 %v498, %v27
    %v501 = vrot.slane %v500, 4
    %v502 = vadd.f32 %v500, %v501
    %v503 = vrot.slane %v502, 2
    %v504 = vadd.f32 %v502, %v503
    %v505 = vrot.slane %v504, 1
    %v506 = vadd.f32 %v504, %v505
    %508 = vset.pattern.permute.xlu0 0
    %509 = vperm.xlu0 %508, %v482
    %v510 = vpop.permute.xlu0 %509
    %v512 = vadd.f32 %v510, %v506
    %v513 = vsel %vm28, %v512, -1000.0
    %s514 = scalar_lea.vmem [#allocation2], 8
    %515 = vst [vmem:[%s514] sm:$0xff] %v513
    // Predicated region
    $region18: #{tpu_custom_call.1} parent=1 // pred_check
      _
    $region19: #{tpu_custom_call.1} parent=1 // pred_check_branch
      %517 = sbr.rel (0) target = $region21
    $region20: #{tpu_custom_call.1} parent=1 // pred_region
      %s519 = ssub.s32 256, 256
      %520 = vsyncadd [#allocation3], %s519
      %s521 = sshll.u32 [#allocation2], 4
      %s522 = int_to_ptr.vmem [resolvable:$true] %s521
      %527 = dma.vmem_to_hbm [thread:$0]  %s522, 256, %s4, [#allocation3], 128, 128, 8
    $region21: #{tpu_custom_call.1} parent=1 // pred_fallthru
      _
    // Predicated region
    $region22: #{tpu_custom_call.1} parent=1 // pred_check
      _
    $region23: #{tpu_custom_call.1} parent=1 // pred_check_branch
      %529 = sbr.rel (0) target = $region25
    $region24: #{tpu_custom_call.1} parent=1 // pred_region
      %530 = dma.done [#allocation3], 256
    $region25: #{tpu_custom_call.1} parent=1 // pred_fallthru
      _
    %531 = vsyncpa [#allocation3], 1

</llo_original>
